<compile_context>
chip_gen: v5e
topology: v5e:2x2
jax: 0.10.0
libtpu: 0.0.40
codegen_flags: <defaults>
</compile_context>

<pallas_src>
import functools

import jax
import jax.numpy as jnp
from jax.experimental import pallas as pl
from jax.experimental.pallas import tpu as pltpu

EPS = 1e-5
K_IN = 28 * 28        # 784 -- fc1 reduction dim (unpadded; 784 % 8 == 0)
H1 = 128
H2 = 64
H2P = 128             # fc2 output width padded to a full lane group
N_OUT = 10
OUT_PAD = 128         # lane-dense logits width (wrapper slices back to 10)
MAX_CHUNK = 512       # batch rows per pipelined x chunk (~1.6 MiB f32 per buffer)


def _round_up(v, m):
    return ((v + m - 1) // m) * m


def _mlp_bn_kernel(x_ref, w1_ref, w2_ref, w3_ref, bn1_ref, bn2_ref, b3_ref,
                   out_ref, h1_ref, stat_ref, *, b_real, b_pad):
    i = pl.program_id(0)
    chunk = x_ref.shape[0]
    inv_b = 1.0 / b_real                     # static Python float

    @pl.when(i == 0)
    def _init():
        stat_ref[...] = jnp.zeros_like(stat_ref)

    # ---- fc1 on this batch chunk: bf16 MXU operands, f32 accumulate, K = 784.
    #      Linear bias omitted: it cancels exactly inside training-mode BN1, and
    #      its absence makes zero pad rows produce h1 == 0 (stats stay exact). ----
    h1c = jnp.dot(x_ref[...].astype(jnp.bfloat16), w1_ref[...],
                  preferred_element_type=jnp.float32)              # (chunk, 128) f32
    off = pl.multiple_of(i * chunk, chunk)
    h1_ref[pl.ds(off, chunk), :] = h1c
    stat_ref[0:1, :] += jnp.sum(h1c, axis=0, keepdims=True)
    stat_ref[1:2, :] += jnp.sum(h1c * h1c, axis=0, keepdims=True)

    # ---- last chunk: BN1+ReLU on resident h1, then fc2 / BN2 / ReLU / fc3. ----
    @pl.when(i == pl.num_programs(0) - 1)
    def _finalize():
        mean1 = stat_ref[0:1, :] * inv_b
        var1 = jnp.maximum(stat_ref[1:2, :] * inv_b - mean1 * mean1, 0.0)
        scale1 = bn1_ref[0:1, :] * jax.lax.rsqrt(var1 + EPS)       # gamma * rsqrt
        shift1 = bn1_ref[1:2, :] - mean1 * scale1                  # beta - mean*scale
        h1 = jnp.maximum(h1_ref[...] * scale1 + shift1, 0.0)       # (b_pad, 128)
        if b_pad != b_real:   # static: zero the pad rows so BN2 stats stay exact
            rows = jax.lax.broadcasted_iota(jnp.int32, h1.shape, 0)
            h1 = jnp.where(rows < b_real, h1, 0.0)

        h2 = jnp.dot(h1.astype(jnp.bfloat16), w2_ref[...],
                     preferred_element_type=jnp.float32)           # (b_pad, 128) f32
        mean2 = jnp.sum(h2, axis=0, keepdims=True) * inv_b
        var2 = jnp.maximum(jnp.sum(h2 * h2, axis=0, keepdims=True) * inv_b
                           - mean2 * mean2, 0.0)
        scale2 = bn2_ref[0:1, :] * jax.lax.rsqrt(var2 + EPS)
        shift2 = bn2_ref[1:2, :] - mean2 * scale2
        h2 = jnp.maximum(h2 * scale2 + shift2, 0.0)                # pad cols stay 0

        logits = jnp.dot(h2.astype(jnp.bfloat16), w3_ref[...],
                         preferred_element_type=jnp.float32)       # (b_pad, 128)
        out_ref[...] = (logits + b3_ref[...]).astype(out_ref.dtype)


def simple_net_with_bn(x, params):
    """Forward pass. x: float array with 28*28 trailing elements per row
    (e.g. (B,1,28,28) or (B,784)); returns (B, 10) f32 logits."""
    w1b, w2b, w3b, bn1, bn2, b3p = params

    x2 = x.reshape(-1, K_IN).astype(jnp.float32)   # torch: x.view(-1, 784); no K pad
    b_real = x2.shape[0]
    chunk = min(MAX_CHUNK, _round_up(b_real, 8))
    b_pad = _round_up(b_real, chunk)
    if b_pad != b_real:
        # Zero rows contribute exactly 0 to h1 (fc1 bias dropped) and are masked
        # before fc2, so batch statistics remain those of the real batch.
        x2 = jnp.pad(x2, ((0, b_pad - b_real), (0, 0)))
    n_chunks = b_pad // chunk

    kernel = functools.partial(_mlp_bn_kernel, b_real=b_real, b_pad=b_pad)

    grid_spec = pltpu.PrefetchScalarGridSpec(
        num_scalar_prefetch=0,
        grid=(n_chunks,),
        in_specs=[
            pl.BlockSpec((chunk, K_IN), lambda i: (i, 0)),     # x: one chunk / step
            pl.BlockSpec((K_IN, H1), lambda i: (0, 0)),        # w1 (resident)
            pl.BlockSpec((H1, H2P), lambda i: (0, 0)),         # w2 (resident)
            pl.BlockSpec((H2P, OUT_PAD), lambda i: (0, 0)),    # w3 (resident)
            pl.BlockSpec((2, H1), lambda i: (0, 0)),           # bn1 gamma/beta
            pl.BlockSpec((2, H2P), lambda i: (0, 0)),          # bn2 gamma/beta
            pl.BlockSpec((1, OUT_PAD), lambda i: (0, 0)),      # fc3 bias
        ],
        out_specs=pl.BlockSpec((b_pad, OUT_PAD), lambda i: (0, 0)),
        scratch_shapes=[
            pltpu.VMEM((b_pad, H1), jnp.float32),   # resident h1
            pltpu.VMEM((2, H1), jnp.float32),       # BN1 running sum / sum-of-sq
        ],
    )

    flops = 2 * b_pad * (K_IN * H1 + H1 * H2P + H2P * OUT_PAD)
    bytes_accessed = (x2.size * 4 + w1b.size * 2 + w2b.size * 2 + w3b.size * 2
                      + bn1.size * 4 + bn2.size * 4 + b3p.size * 4
                      + b_pad * OUT_PAD * 4)

    # Resident VMEM = h1 scratch + output block (+ double-buffered x chunk + weights).
    # v7x has only 64 MiB physical VMEM: beyond B ~ 18K the resident h1/out must be
    # streamed/tiled (or the batch split across the two TensorCores with a BN
    # partial-stat exchange); v5e/v6e (128 MiB) go roughly twice as far.
    vmem_est = (2 * chunk * K_IN * 4            # x chunk, double buffered (f32)
                + b_pad * H1 * 4                # resident h1 scratch
                + 2 * b_pad * OUT_PAD * 4       # output block
                + 2 * (w1b.size * 2 + w2b.size * 2 + w3b.size * 2)
                + (2 << 20))                    # slack
    vmem_limit = int(max(32 << 20, min(vmem_est, 60 << 20)))

    out_pad = pl.pallas_call(
        kernel,
        out_shape=jax.ShapeDtypeStruct((b_pad, OUT_PAD), jnp.float32),
        grid_spec=grid_spec,
        compiler_params=pltpu.CompilerParams(
            dimension_semantics=("arbitrary",),   # BN couples the whole batch
            vmem_limit_bytes=vmem_limit),
        cost_estimate=pl.CostEstimate(
            flops=flops,
            transcendentals=2 * (H1 + H2P),
            bytes_accessed=int(bytes_accessed)),
    )(x2, w1b, w2b, w3b, bn1, bn2, b3p)

    return out_pad[:b_real, :N_OUT]


def init_params(key):
    """Parameters matching the PyTorch module (Linear default init, BN gamma=1,
    beta=0).  Linear weights stored transposed (in, out) as bf16 MXU operands;
    fc2/fc3 widened to 128 lanes with zero padding; fc1/fc2 biases not
    materialized (they cancel exactly under training-mode BatchNorm)."""
    def linear(k, fan_in, fan_out):
        kw, kb = jax.random.split(k)
        bound = 1.0 / jnp.sqrt(fan_in)
        w = jax.random.uniform(kw, (fan_in, fan_out), jnp.float32, -bound, bound)
        b = jax.random.uniform(kb, (1, fan_out), jnp.float32, -bound, bound)
        return w, b

    k1, k2, k3 = jax.random.split(key, 3)
    w1, _b1 = linear(k1, K_IN, H1)   # _b1 cancels in BN1 (training mode)
    w2, _b2 = linear(k2, H1, H2)     # _b2 cancels in BN2 (training mode)
    w3, b3 = linear(k3, H2, N_OUT)

    w1b = w1.astype(jnp.bfloat16)                                              # (784,128)
    w2b = jnp.pad(w2, ((0, 0), (0, H2P - H2))).astype(jnp.bfloat16)            # (128,128)
    w3b = jnp.pad(w3, ((0, H2P - H2), (0, OUT_PAD - N_OUT))).astype(jnp.bfloat16)  # (128,128)
    b3p = jnp.pad(b3, ((0, 0), (0, OUT_PAD - N_OUT))).astype(jnp.float32)      # (1,128)

    # BN affine params packed as row 0 = gamma, row 1 = beta.  bn2's padded columns
    # get gamma = beta = 0 so the padded lanes of h2 stay exactly zero.
    bn1 = jnp.concatenate([jnp.ones((1, H1)), jnp.zeros((1, H1))], 0).astype(jnp.float32)
    bn2 = jnp.concatenate(
        [jnp.pad(jnp.ones((1, H2)), ((0, 0), (0, H2P - H2))), jnp.zeros((1, H2P))],
        0).astype(jnp.float32)
    return (w1b, w2b, w3b, bn1, bn2, b3p)


def _reference_forward(x, params):
    """Pure-JAX reference mirroring the kernel's precision (bf16 MXU operands,
    f32 accumulation/elementwise, one-pass variance) for a tight check."""
    w1b, w2b, w3b, bn1, bn2, b3p = params
    x2 = x.reshape(-1, K_IN).astype(jnp.float32)
    n = x2.shape[0]

    def bn_relu(h, g, bt):
        mean = jnp.sum(h, axis=0, keepdims=True) / n
        var = jnp.maximum(jnp.sum(h * h, axis=0, keepdims=True) / n - mean * mean, 0.0)
        return jnp.maximum((h - mean) * jax.lax.rsqrt(var + EPS) * g + bt, 0.0)

    h1 = jnp.dot(x2.astype(jnp.bfloat16), w1b, preferred_element_type=jnp.float32)
    h1 = bn_relu(h1, bn1[0:1], bn1[1:2])
    h2 = jnp.dot(h1.astype(jnp.bfloat16), w2b, preferred_element_type=jnp.float32)
    h2 = bn_relu(h2, bn2[0:1], bn2[1:2])
    out = jnp.dot(h2.astype(jnp.bfloat16), w3b, preferred_element_type=jnp.float32) + b3p
    return out[:, :N_OUT]


if __name__ == "__main__":
    key = jax.random.PRNGKey(0)
    k_param, k_x = jax.random.split(key)

    params = init_params(k_param)
    # Small MNIST-like batch: (B, 1, 28, 28); forward flattens to (B, 784).
    # For real benchmarking use B >= 256 so DMA/MXU, not per-call overhead, dominates.
    x = jax.random.normal(k_x, (8, 1, 28, 28), jnp.float32)

    logits = simple_net_with_bn(x, params)
    jax.block_until_ready(logits)

    assert logits.shape == (8, N_OUT), logits.shape
    assert bool(jnp.all(jnp.isfinite(logits)))

    ref = _reference_forward(x, params)
    max_err = float(jnp.max(jnp.abs(logits - ref)))
    assert max_err < 5e-2, max_err

    print("KERNEL_OK")
</pallas_src>

<mosaic_0001>
module attributes {stable_mosaic.version = 11 : i64} {
  func.func @_mlp_bn_kernel(%arg0: i32, %arg1: memref<8x784xf32, #tpu.memory_space<vmem>>, %arg2: memref<784x128xbf16, #tpu.memory_space<vmem>>, %arg3: memref<128x128xbf16, #tpu.memory_space<vmem>>, %arg4: memref<128x128xbf16, #tpu.memory_space<vmem>>, %arg5: memref<2x128xf32, #tpu.memory_space<vmem>>, %arg6: memref<2x128xf32, #tpu.memory_space<vmem>>, %arg7: memref<1x128xf32, #tpu.memory_space<vmem>>, %arg8: memref<8x128xf32, #tpu.memory_space<vmem>>, %arg9: memref<8x128xf32, #tpu.memory_space<vmem>>, %arg10: memref<2x128xf32, #tpu.memory_space<vmem>>) attributes {dimension_semantics = [#tpu.dimension_semantics<arbitrary>], iteration_bounds = array<i64: 1>, scalar_prefetch = 0 : i64, scratch_operands = 2 : i64, tpu.core_type = #tpu.core_type<tc>, window_params = [{transform_indices = @transform_0, window_bounds = array<i64: 8, 784>}, {pipeline_mode = #tpu.pipeline_mode<synchronous>, transform_indices = @transform_1, window_bounds = array<i64: 784, 128>}, {pipeline_mode = #tpu.pipeline_mode<synchronous>, transform_indices = @transform_2, window_bounds = array<i64: 128, 128>}, {pipeline_mode = #tpu.pipeline_mode<synchronous>, transform_indices = @transform_3, window_bounds = array<i64: 128, 128>}, {pipeline_mode = #tpu.pipeline_mode<synchronous>, transform_indices = @transform_4, window_bounds = array<i64: 2, 128>}, {pipeline_mode = #tpu.pipeline_mode<synchronous>, transform_indices = @transform_5, window_bounds = array<i64: 2, 128>}, {pipeline_mode = #tpu.pipeline_mode<synchronous>, transform_indices = @transform_6, window_bounds = array<i64: 1, 128>}, {pipeline_mode = #tpu.pipeline_mode<synchronous>, transform_indices = @transform_7, window_bounds = array<i64: 8, 128>}]} {
    %c0_i32 = arith.constant 0 : i32
    %0 = arith.cmpi eq, %arg0, %c0_i32 : i32
    %1 = arith.extui %0 : i1 to i32
    %c0_i32_0 = arith.constant 0 : i32
    %2 = arith.cmpi ne, %1, %c0_i32_0 : i32
    scf.if %2 {
      %cst_16 = arith.constant 0.000000e+00 : f32
      %25 = vector.broadcast %cst_16 : f32 to vector<2x128xf32>
      %c0_17 = arith.constant 0 : index
      %c0_18 = arith.constant 0 : index
      %26 = vector.load %arg10[%c0_17, %c0_18] : memref<2x128xf32, #tpu.memory_space<vmem>>, vector<2x128xf32>
      tpu.vector_store %arg10[%c0_17, %c0_18], %25 {strides = array<i32>} : memref<2x128xf32, #tpu.memory_space<vmem>>, vector<2x128xf32>,
    } else {
    }
    %c0 = arith.constant 0 : index
    %c0_1 = arith.constant 0 : index
    %3 = vector.load %arg1[%c0, %c0_1] : memref<8x784xf32, #tpu.memory_space<vmem>>, vector<8x784xf32>
    %4 = arith.truncf %3 : vector<8x784xf32> to vector<8x784xbf16>
    %c0_2 = arith.constant 0 : index
    %c0_3 = arith.constant 0 : index
    %5 = vector.load %arg2[%c0_2, %c0_3] : memref<784x128xbf16, #tpu.memory_space<vmem>>, vector<784x128xbf16>
    %cst = arith.constant dense<0.000000e+00> : vector<8x128xf32>
    %6 = tpu.matmul %4, %5, %cst {dimension_numbers = #tpu.dot_dimension_numbers<[1], [0], [0], [1], [0, 0, 1, 1], [], []>} : vector<8x784xbf16>, vector<784x128xbf16>, vector<8x128xf32> -> vector<8x128xf32>
    %c8_i32 = arith.constant 8 : i32
    %7 = arith.muli %arg0, %c8_i32 : i32
    %8 = tpu.assume_multiple %7, 8 : i32
    %9 = arith.index_cast %8 : i32 to index
    %c0_4 = arith.constant 0 : index
    %10 = vector.load %arg9[%9, %c0_4] : memref<8x128xf32, #tpu.memory_space<vmem>>, vector<8x128xf32>
    tpu.vector_store %arg9[%9, %c0_4], %6 {strides = array<i32>} : memref<8x128xf32, #tpu.memory_space<vmem>>, vector<8x128xf32>,
    %c0_5 = arith.constant 0 : index
    %c0_6 = arith.constant 0 : index
    %11 = vector.load %arg10[%c0_5, %c0_6] : memref<2x128xf32, #tpu.memory_space<vmem>>, vector<1x128xf32>
    %cst_7 = arith.constant dense<0.000000e+00> : vector<128xf32>
    %12 = vector.multi_reduction <add>, %6, %cst_7 [0] : vector<8x128xf32> to vector<128xf32>
    %13 = vector.shape_cast %12 : vector<128xf32> to vector<1x128xf32>
    %14 = arith.addf %11, %13 : vector<1x128xf32>
    %c0_8 = arith.constant 0 : index
    %c0_9 = arith.constant 0 : index
    %15 = vector.load %arg10[%c0_8, %c0_9] : memref<2x128xf32, #tpu.memory_space<vmem>>, vector<1x128xf32>
    tpu.vector_store %arg10[%c0_8, %c0_9], %14 {strides = array<i32>} : memref<2x128xf32, #tpu.memory_space<vmem>>, vector<1x128xf32>,
    %c1 = arith.constant 1 : index
    %c0_10 = arith.constant 0 : index
    %16 = vector.load %arg10[%c1, %c0_10] : memref<2x128xf32, #tpu.memory_space<vmem>>, vector<1x128xf32>
    %17 = arith.mulf %6, %6 : vector<8x128xf32>
    %cst_11 = arith.constant dense<0.000000e+00> : vector<128xf32>
    %18 = vector.multi_reduction <add>, %17, %cst_11 [0] : vector<8x128xf32> to vector<128xf32>
    %19 = vector.shape_cast %18 : vector<128xf32> to vector<1x128xf32>
    %20 = arith.addf %16, %19 : vector<1x128xf32>
    %c1_12 = arith.constant 1 : index
    %c0_13 = arith.constant 0 : index
    %21 = vector.load %arg10[%c1_12, %c0_13] : memref<2x128xf32, #tpu.memory_space<vmem>>, vector<1x128xf32>
    tpu.vector_store %arg10[%c1_12, %c0_13], %20 {strides = array<i32>} : memref<2x128xf32, #tpu.memory_space<vmem>>, vector<1x128xf32>,
    %c0_i32_14 = arith.constant 0 : i32
    %22 = arith.cmpi eq, %arg0, %c0_i32_14 : i32
    %23 = arith.extui %22 : i1 to i32
    %c0_i32_15 = arith.constant 0 : i32
    %24 = arith.cmpi ne, %23, %c0_i32_15 : i32
    scf.if %24 {
      %c0_16 = arith.constant 0 : index
      %c0_17 = arith.constant 0 : index
      %25 = vector.load %arg10[%c0_16, %c0_17] : memref<2x128xf32, #tpu.memory_space<vmem>>, vector<1x128xf32>
      %cst_18 = arith.constant 1.250000e-01 : f32
      %26 = vector.broadcast %cst_18 : f32 to vector<1x128xf32>
      %27 = arith.mulf %25, %26 : vector<1x128xf32>
      %c1_19 = arith.constant 1 : index
      %c0_20 = arith.constant 0 : index
      %28 = vector.load %arg10[%c1_19, %c0_20] : memref<2x128xf32, #tpu.memory_space<vmem>>, vector<1x128xf32>
      %cst_21 = arith.constant 1.250000e-01 : f32
      %29 = vector.broadcast %cst_21 : f32 to vector<1x128xf32>
      %30 = arith.mulf %28, %29 : vector<1x128xf32>
      %31 = arith.mulf %27, %27 : vector<1x128xf32>
      %32 = arith.subf %30, %31 : vector<1x128xf32>
      %cst_22 = arith.constant 0.000000e+00 : f32
      %33 = vector.broadcast %cst_22 : f32 to vector<1x128xf32>
      %34 = arith.maximumf %32, %33 : vector<1x128xf32>
      %c0_23 = arith.constant 0 : index
      %c0_24 = arith.constant 0 : index
      %35 = vector.load %arg5[%c0_23, %c0_24] : memref<2x128xf32, #tpu.memory_space<vmem>>, vector<1x128xf32>
      %cst_25 = arith.constant 9.99999974E-6 : f32
      %36 = vector.broadcast %cst_25 : f32 to vector<1x128xf32>
      %37 = arith.addf %34, %36 : vector<1x128xf32>
      %38 = math.rsqrt %37 : vector<1x128xf32>
      %39 = arith.mulf %35, %38 : vector<1x128xf32>
      %c1_26 = arith.constant 1 : index
      %c0_27 = arith.constant 0 : index
      %40 = vector.load %arg5[%c1_26, %c0_27] : memref<2x128xf32, #tpu.memory_space<vmem>>, vector<1x128xf32>
      %41 = arith.mulf %27, %39 : vector<1x128xf32>
      %42 = arith.subf %40, %41 : vector<1x128xf32>
      %c0_28 = arith.constant 0 : index
      %c0_29 = arith.constant 0 : index
      %43 = vector.load %arg9[%c0_28, %c0_29] : memref<8x128xf32, #tpu.memory_space<vmem>>, vector<8x128xf32>
      %44 = vector.broadcast %39 : vector<1x128xf32> to vector<8x128xf32>
      %45 = arith.mulf %43, %44 : vector<8x128xf32>
      %46 = vector.broadcast %42 : vector<1x128xf32> to vector<8x128xf32>
      %47 = arith.addf %45, %46 : vector<8x128xf32>
      %cst_30 = arith.constant 0.000000e+00 : f32
      %48 = vector.broadcast %cst_30 : f32 to vector<8x128xf32>
      %49 = arith.maximumf %47, %48 : vector<8x128xf32>
      %50 = arith.truncf %49 : vector<8x128xf32> to vector<8x128xbf16>
      %c0_31 = arith.constant 0 : index
      %c0_32 = arith.constant 0 : index
      %51 = vector.load %arg3[%c0_31, %c0_32] : memref<128x128xbf16, #tpu.memory_space<vmem>>, vector<128x128xbf16>
      %cst_33 = arith.constant dense<0.000000e+00> : vector<8x128xf32>
      %52 = tpu.matmul %50, %51, %cst_33 {dimension_numbers = #tpu.dot_dimension_numbers<[1], [0], [0], [1], [0, 0, 1, 1], [], []>} : vector<8x128xbf16>, vector<128x128xbf16>, vector<8x128xf32> -> vector<8x128xf32>
      %cst_34 = arith.constant dense<0.000000e+00> : vector<128xf32>
      %53 = vector.multi_reduction <add>, %52, %cst_34 [0] : vector<8x128xf32> to vector<128xf32>
      %54 = vector.shape_cast %53 : vector<128xf32> to vector<1x128xf32>
      %cst_35 = arith.constant 1.250000e-01 : f32
      %55 = vector.broadcast %cst_35 : f32 to vector<1x128xf32>
      %56 = arith.mulf %54, %55 : vector<1x128xf32>
      %57 = arith.mulf %52, %52 : vector<8x128xf32>
      %cst_36 = arith.constant dense<0.000000e+00> : vector<128xf32>
      %58 = vector.multi_reduction <add>, %57, %cst_36 [0] : vector<8x128xf32> to vector<128xf32>
      %59 = vector.shape_cast %58 : vector<128xf32> to vector<1x128xf32>
      %cst_37 = arith.constant 1.250000e-01 : f32
      %60 = vector.broadcast %cst_37 : f32 to vector<1x128xf32>
      %61 = arith.mulf %59, %60 : vector<1x128xf32>
      %62 = arith.mulf %56, %56 : vector<1x128xf32>
      %63 = arith.subf %61, %62 : vector<1x128xf32>
      %cst_38 = arith.constant 0.000000e+00 : f32
      %64 = vector.broadcast %cst_38 : f32 to vector<1x128xf32>
      %65 = arith.maximumf %63, %64 : vector<1x128xf32>
      %c0_39 = arith.constant 0 : index
      %c0_40 = arith.constant 0 : index
      %66 = vector.load %arg6[%c0_39, %c0_40] : memref<2x128xf32, #tpu.memory_space<vmem>>, vector<1x128xf32>
      %cst_41 = arith.constant 9.99999974E-6 : f32
      %67 = vector.broadcast %cst_41 : f32 to vector<1x128xf32>
      %68 = arith.addf %65, %67 : vector<1x128xf32>
      %69 = math.rsqrt %68 : vector<1x128xf32>
      %70 = arith.mulf %66, %69 : vector<1x128xf32>
      %c1_42 = arith.constant 1 : index
      %c0_43 = arith.constant 0 : index
      %71 = vector.load %arg6[%c1_42, %c0_43] : memref<2x128xf32, #tpu.memory_space<vmem>>, vector<1x128xf32>
      %72 = arith.mulf %56, %70 : vector<1x128xf32>
      %73 = arith.subf %71, %72 : vector<1x128xf32>
      %74 = vector.broadcast %70 : vector<1x128xf32> to vector<8x128xf32>
      %75 = arith.mulf %52, %74 : vector<8x128xf32>
      %76 = vector.broadcast %73 : vector<1x128xf32> to vector<8x128xf32>
      %77 = arith.addf %75, %76 : vector<8x128xf32>
      %cst_44 = arith.constant 0.000000e+00 : f32
      %78 = vector.broadcast %cst_44 : f32 to vector<8x128xf32>
      %79 = arith.maximumf %77, %78 : vector<8x128xf32>
      %80 = arith.truncf %79 : vector<8x128xf32> to vector<8x128xbf16>
      %c0_45 = arith.constant 0 : index
      %c0_46 = arith.constant 0 : index
      %81 = vector.load %arg4[%c0_45, %c0_46] : memref<128x128xbf16, #tpu.memory_space<vmem>>, vector<128x128xbf16>
      %cst_47 = arith.constant dense<0.000000e+00> : vector<8x128xf32>
      %82 = tpu.matmul %80, %81, %cst_47 {dimension_numbers = #tpu.dot_dimension_numbers<[1], [0], [0], [1], [0, 0, 1, 1], [], []>} : vector<8x128xbf16>, vector<128x128xbf16>, vector<8x128xf32> -> vector<8x128xf32>
      %c0_48 = arith.constant 0 : index
      %c0_49 = arith.constant 0 : index
      %83 = vector.load %arg7[%c0_48, %c0_49] : memref<1x128xf32, #tpu.memory_space<vmem>>, vector<1x128xf32>
      %84 = vector.broadcast %83 : vector<1x128xf32> to vector<8x128xf32>
      %85 = arith.addf %82, %84 : vector<8x128xf32>
      %c0_50 = arith.constant 0 : index
      %c0_51 = arith.constant 0 : index
      %86 = vector.load %arg8[%c0_50, %c0_51] : memref<8x128xf32, #tpu.memory_space<vmem>>, vector<8x128xf32>
      tpu.vector_store %arg8[%c0_50, %c0_51], %85 {strides = array<i32>} : memref<8x128xf32, #tpu.memory_space<vmem>>, vector<8x128xf32>,
    } else {
    }
    return
  }
  func.func @transform_0(%arg0: i32) -> (i32, i32) {
    %c0_i32 = arith.constant 0 : i32
    %c0_i32_0 = arith.constant 0 : i32
    return %arg0, %c0_i32 : i32, i32
  }
  func.func @transform_1(%arg0: i32) -> (i32, i32) {
    %c0_i32 = arith.constant 0 : i32
    %c0_i32_0 = arith.constant 0 : i32
    %c0_i32_1 = arith.constant 0 : i32
    return %c0_i32, %c0_i32_0 : i32, i32
  }
  func.func @transform_2(%arg0: i32) -> (i32, i32) {
    %c0_i32 = arith.constant 0 : i32
    %c0_i32_0 = arith.constant 0 : i32
    %c0_i32_1 = arith.constant 0 : i32
    return %c0_i32, %c0_i32_0 : i32, i32
  }
  func.func @transform_3(%arg0: i32) -> (i32, i32) {
    %c0_i32 = arith.constant 0 : i32
    %c0_i32_0 = arith.constant 0 : i32
    %c0_i32_1 = arith.constant 0 : i32
    return %c0_i32, %c0_i32_0 : i32, i32
  }
  func.func @transform_4(%arg0: i32) -> (i32, i32) {
    %c0_i32 = arith.constant 0 : i32
    %c0_i32_0 = arith.constant 0 : i32
    %c0_i32_1 = arith.constant 0 : i32
    return %c0_i32, %c0_i32_0 : i32, i32
  }
  func.func @transform_5(%arg0: i32) -> (i32, i32) {
    %c0_i32 = arith.constant 0 : i32
    %c0_i32_0 = arith.constant 0 : i32
    %c0_i32_1 = arith.constant 0 : i32
    return %c0_i32, %c0_i32_0 : i32, i32
  }
  func.func @transform_6(%arg0: i32) -> (i32, i32) {
    %c0_i32 = arith.constant 0 : i32
    %c0_i32_0 = arith.constant 0 : i32
    %c0_i32_1 = arith.constant 0 : i32
    return %c0_i32, %c0_i32_0 : i32, i32
  }
  func.func @transform_7(%arg0: i32) -> (i32, i32) {
    %c0_i32 = arith.constant 0 : i32
    %c0_i32_0 = arith.constant 0 : i32
    %c0_i32_1 = arith.constant 0 : i32
    return %c0_i32, %c0_i32_0 : i32, i32
  }
}

</mosaic_0001>

<llo_original>
// kernel: tpu_custom_call.1
$region0: #{tpu_custom_call.1}
  #allocation0 [shape = 'u32[]', space=smem, size = 0x4, offset = 0x4, fixed_abs, tag = 'smem constant byte address 0x4 - core index']
  #allocation1 [shape = 'u32[72,128]{1,0:T(1,128)}', space=vmem, size = 0x9000, scoped, tag = 'internal scratch']
  #allocation2 [shape = 'f32[8,128]{1,0:T(8,128)}', space=vmem, size = 0x1000, scoped, tag = 'scratch operand']
  #allocation3 [shape = 'f32[2,128]{1,0:T(2,128)}', space=vmem, size = 0x400, scoped, tag = 'scratch operand']
  %s0 = inlined_call_operand.hbm [shape: f32[8,784], index: 0, kind: input, shape index: {}]
  %s1 = inlined_call_operand.hbm [shape: bf16[784,128], index: 1, kind: input, shape index: {}]
  %s2 = inlined_call_operand.hbm [shape: bf16[128,128], index: 2, kind: input, shape index: {}]
  %s3 = inlined_call_operand.hbm [shape: bf16[128,128], index: 3, kind: input, shape index: {}]
  %s4 = inlined_call_operand.vmem [shape: f32[2,128], index: 4, kind: input, shape index: {}]
  %s5 = inlined_call_operand.vmem [shape: f32[2,128], index: 5, kind: input, shape index: {}]
  %s6 = inlined_call_operand.vmem [shape: f32[1,128], index: 6, kind: input, shape index: {}]
  %s7 = inlined_call_operand.hbm [shape: f32[8,128], index: 7, kind: output, shape index: {}]
  %s8 = sld [smem:[#allocation0]]
  $region62: #{tpu_custom_call.1} parent=0
    _
  %s10 = ssub.s32 1, %s8
  %s11 = scalar_select 0, %s10, %s8
  $region1: #{tpu_custom_call.1} parent=0
    #allocation4 [shape = 'u8[28672]{0}', space=vmem, size = 0x7000, scoped, tag = 'input window, operand 0, single buffered']
    #allocation5 [shape = 's32[1]{0}', space=sflag, size = 0x4, scoped, tag = 'scoped memory for tpu_custom_call.1']
    #allocation6 [shape = 's32[1]{0}', space=sflag, size = 0x4, scoped, tag = 'scoped memory for tpu_custom_call.1']
    #allocation7 [shape = 'u8[200704]{0}', space=vmem, size = 0x31000, scoped, tag = 'input window, operand 1, single buffered']
    #allocation8 [shape = 's32[1]{0}', space=sflag, size = 0x4, scoped, tag = 'scoped memory for tpu_custom_call.1']
    #allocation9 [shape = 'u8[32768]{0}', space=vmem, size = 0x8000, scoped, tag = 'input window, operand 2, single buffered']
    #allocation10 [shape = 'u8[32768]{0}', space=vmem, size = 0x8000, scoped, tag = 'input window, operand 3, single buffered']
    #allocation11 [shape = 's32[1]{0}', space=sflag, size = 0x4, scoped, tag = 'scoped memory for tpu_custom_call.1']
    #allocation12 [shape = 'u8[4096]{0}', space=vmem, size = 0x1000, scoped, tag = 'output window, operand 0, single buffered']
    %12 = vsyncpa [#allocation5], 0
    %13 = vsyncpa [#allocation8], 0
    %14 = vsyncpa [#allocation11], 0
    %15 = vsyncpa [#allocation6], 0
    // Predicated region
    $region2: #{tpu_custom_call.1} parent=1 // pred_check
      _
    $region3: #{tpu_custom_call.1} parent=1 // pred_check_branch
      %17 = sbr.rel (0) target = $region5
    $region4: #{tpu_custom_call.1} parent=1 // pred_region
      %19 = vsyncadd [#allocation5], 0
      %s21 = sshll.u32 %s0, 4
      %s22 = int_to_ptr.hbm [resolvable:$true] %s21
      %s23 = sshll.u32 [#allocation4], 4
      %s24 = int_to_ptr.vmem [resolvable:$true] %s23
      %26 = dma.hbm_to_vmem [thread:$0]  %s22, 896, %s24, [#allocation5]
    $region5: #{tpu_custom_call.1} parent=1 // pred_fallthru
      _
    // Predicated region
    $region6: #{tpu_custom_call.1} parent=1 // pred_check
      _
    $region7: #{tpu_custom_call.1} parent=1 // pred_check_branch
      %28 = sbr.rel (0) target = $region9
    $region8: #{tpu_custom_call.1} parent=1 // pred_region
      %30 = vsyncadd [#allocation8], 0
      %s31 = sshll.u32 %s1, 4
      %s32 = int_to_ptr.hbm [resolvable:$true] %s31
      %s33 = sshll.u32 [#allocation7], 4
      %s34 = int_to_ptr.vmem [resolvable:$true] %s33
      %39 = dma.hbm_to_vmem [thread:$0]  %s32, 6272, %s34, [#allocation8], 64, 64, 4
    $region9: #{tpu_custom_call.1} parent=1 // pred_fallthru
      _
    // Predicated region
    $region10: #{tpu_custom_call.1} parent=1 // pred_check
      _
    $region11: #{tpu_custom_call.1} parent=1 // pred_check_branch
      %41 = sbr.rel (0) target = $region13
    $region12: #{tpu_custom_call.1} parent=1 // pred_region
      %43 = vsyncadd [#allocation8], 0
      %s44 = sshll.u32 %s2, 4
      %s45 = int_to_ptr.hbm [resolvable:$true] %s44
      %s46 = sshll.u32 [#allocation9], 4
      %s47 = int_to_ptr.vmem [resolvable:$true] %s46
      %52 = dma.hbm_to_vmem [thread:$0]  %s45, 1024, %s47, [#allocation8], 64, 64, 4
    $region13: #{tpu_custom_call.1} parent=1 // pred_fallthru
      _
    // Predicated region
    $region14: #{tpu_custom_call.1} parent=1 // pred_check
      _
    $region15: #{tpu_custom_call.1} parent=1 // pred_check_branch
      %54 = sbr.rel (0) target = $region17
    $region16: #{tpu_custom_call.1} parent=1 // pred_region
      %56 = vsyncadd [#allocation11], 0
      %s57 = sshll.u32 %s3, 4
      %s58 = int_to_ptr.hbm [resolvable:$true] %s57
      %s59 = sshll.u32 [#allocation10], 4
      %s60 = int_to_ptr.vmem [resolvable:$true] %s59
      %65 = dma.hbm_to_vmem [thread:$0]  %s58, 1024, %s60, [#allocation11], 64, 64, 4
    $region17: #{tpu_custom_call.1} parent=1 // pred_fallthru
      _
    // Predicated region
    $region18: #{tpu_custom_call.1} parent=1 // pred_check
      _
    $region19: #{tpu_custom_call.1} parent=1 // pred_check_branch
      %67 = sbr.rel (0) target = $region21
    $region20: #{tpu_custom_call.1} parent=1 // pred_region
      _
    $region21: #{tpu_custom_call.1} parent=1 // pred_fallthru
      _
    // Predicated region
    $region22: #{tpu_custom_call.1} parent=1 // pred_check
      _
    $region23: #{tpu_custom_call.1} parent=1 // pred_check_branch
      %69 = sbr.rel (0) target = $region25
    $region24: #{tpu_custom_call.1} parent=1 // pred_region
      _
    $region25: #{tpu_custom_call.1} parent=1 // pred_fallthru
      _
    // Predicated region
    $region26: #{tpu_custom_call.1} parent=1 // pred_check
      _
    $region27: #{tpu_custom_call.1} parent=1 // pred_check_branch
      %71 = sbr.rel (0) target = $region29
    $region28: #{tpu_custom_call.1} parent=1 // pred_region
      _
    $region29: #{tpu_custom_call.1} parent=1 // pred_fallthru
      _
    // Predicated region
    $region30: #{tpu_custom_call.1} parent=1 // pred_check
      _
    $region31: #{tpu_custom_call.1} parent=1 // pred_check_branch
      %73 = sbr.rel (0) target = $region33
    $region32: #{tpu_custom_call.1} parent=1 // pred_region
      %75 = dma.done [#allocation5], 896
    $region33: #{tpu_custom_call.1} parent=1 // pred_fallthru
      _
    // Predicated region
    $region34: #{tpu_custom_call.1} parent=1 // pred_check
      _
    $region35: #{tpu_custom_call.1} parent=1 // pred_check_branch
      %77 = sbr.rel (0) target = $region37
    $region36: #{tpu_custom_call.1} parent=1 // pred_region
      %79 = dma.done [#allocation8], 6272
    $region37: #{tpu_custom_call.1} parent=1 // pred_fallthru
      _
    // Predicated region
    $region38: #{tpu_custom_call.1} parent=1 // pred_check
      _
    $region39: #{tpu_custom_call.1} parent=1 // pred_check_branch
      %81 = sbr.rel (0) target = $region41
    $region40: #{tpu_custom_call.1} parent=1 // pred_region
      %83 = dma.done [#allocation8], 1024
    $region41: #{tpu_custom_call.1} parent=1 // pred_fallthru
      _
    // Predicated region
    $region42: #{tpu_custom_call.1} parent=1 // pred_check
      _
    $region43: #{tpu_custom_call.1} parent=1 // pred_check_branch
      %85 = sbr.rel (0) target = $region45
    $region44: #{tpu_custom_call.1} parent=1 // pred_region
      %87 = dma.done [#allocation11], 1024
    $region45: #{tpu_custom_call.1} parent=1 // pred_fallthru
      _
    %p89 = scmp.eq.s32.totalorder 0, 0
    // Predicated region
    $region46: #{tpu_custom_call.1} parent=1 // pred_check
      %p90 = pneg %p89
    $region47: #{tpu_custom_call.1} parent=1 // pred_check_branch
      %92 = sbr.rel (%p90) target = $region49
    $region48: #{tpu_custom_call.1} parent=1 // pred_region
      %93 = vst [vmem:[#allocation3] sm:$0x3] 0.0
    $region49: #{tpu_custom_call.1} parent=1 // pred_fallthru
      _
    %v94 = vld [vmem:[#allocation4] sm:$0xff]
    %v95 = vld [vmem:[#allocation4 + $0x8] sm:$0xff]
    %v96 = vld [vmem:[#allocation4 + $0x10] sm:$0xff]
    %v97 = vld [vmem:[#allocation4 + $0x18] sm:$0xff]
    %v98 = vld [vmem:[#allocation4 + $0x20] sm:$0xff]
    %v99 = vld [vmem:[#allocation4 + $0x28] sm:$0xff]
    %v100 = vld [vmem:[#allocation4 + $0x30] sm:$0xff]
    %v101 = vpack.c.bf16 %v94, %v94
    %v102 = vpack.c.bf16 %v95, %v95
    %v103 = vpack.c.bf16 %v96, %v96
    %v104 = vpack.c.bf16 %v97, %v97
    %v105 = vpack.c.bf16 %v98, %v98
    %v106 = vpack.c.bf16 %v99, %v99
    %v107 = vpack.c.bf16 %v100, %v100
    %v108 = vld [vmem:[#allocation7] sm:$0xf]
    %v109 = vld [vmem:[#allocation7 + $0x4] sm:$0xf]
    %v110 = vld [vmem:[#allocation7 + $0x8] sm:$0xf]
    %v111 = vld [vmem:[#allocation7 + $0xc] sm:$0xf]
    %v112 = vld [vmem:[#allocation7 + $0x10] sm:$0xf]
    %v113 = vld [vmem:[#allocation7 + $0x14] sm:$0xf]
    %v114 = vld [vmem:[#allocation7 + $0x18] sm:$0xf]
    %v115 = vld [vmem:[#allocation7 + $0x1c] sm:$0xf]
    %v116 = vld [vmem:[#allocation7 + $0x20] sm:$0xf]
    %v117 = vld [vmem:[#allocation7 + $0x24] sm:$0xf]
    %v118 = vld [vmem:[#allocation7 + $0x28] sm:$0xf]
    %v119 = vld [vmem:[#allocation7 + $0x2c] sm:$0xf]
    %v120 = vld [vmem:[#allocation7 + $0x30] sm:$0xf]
    %v121 = vld [vmem:[#allocation7 + $0x34] sm:$0xf]
    %v122 = vld [vmem:[#allocation7 + $0x38] sm:$0xf]
    %v123 = vld [vmem:[#allocation7 + $0x3c] sm:$0xf]
    %v124 = vld [vmem:[#allocation7 + $0x40] sm:$0xf]
    %v125 = vld [vmem:[#allocation7 + $0x44] sm:$0xf]
    %v126 = vld [vmem:[#allocation7 + $0x48] sm:$0xf]
    %v127 = vld [vmem:[#allocation7 + $0x4c] sm:$0xf]
    %v128 = vld [vmem:[#allocation7 + $0x50] sm:$0xf]
    %v129 = vld [vmem:[#allocation7 + $0x54] sm:$0xf]
    %v130 = vld [vmem:[#allocation7 + $0x58] sm:$0xf]
    %v131 = vld [vmem:[#allocation7 + $0x5c] sm:$0xf]
    %v132 = vld [vmem:[#allocation7 + $0x60] sm:$0xf]
    %v133 = vld [vmem:[#allocation7 + $0x64] sm:$0xf]
    %v134 = vld [vmem:[#allocation7 + $0x68] sm:$0xf]
    %v135 = vld [vmem:[#allocation7 + $0x6c] sm:$0xf]
    %v136 = vld [vmem:[#allocation7 + $0x70] sm:$0xf]
    %v137 = vld [vmem:[#allocation7 + $0x74] sm:$0xf]
    %v138 = vld [vmem:[#allocation7 + $0x78] sm:$0xf]
    %v139 = vld [vmem:[#allocation7 + $0x7c] sm:$0xf]
    %v140 = vld [vmem:[#allocation7 + $0x80] sm:$0xf]
    %v141 = vld [vmem:[#allocation7 + $0x84] sm:$0xf]
    %v142 = vld [vmem:[#allocation7 + $0x88] sm:$0xf]
    %v143 = vld [vmem:[#allocation7 + $0x8c] sm:$0xf]
    %v144 = vld [vmem:[#allocation7 + $0x90] sm:$0xf]
    %v145 = vld [vmem:[#allocation7 + $0x94] sm:$0xf]
    %v146 = vld [vmem:[#allocation7 + $0x98] sm:$0xf]
    %v147 = vld [vmem:[#allocation7 + $0x9c] sm:$0xf]
    %v148 = vld [vmem:[#allocation7 + $0xa0] sm:$0xf]
    %v149 = vld [vmem:[#allocation7 + $0xa4] sm:$0xf]
    %v150 = vld [vmem:[#allocation7 + $0xa8] sm:$0xf]
    %v151 = vld [vmem:[#allocation7 + $0xac] sm:$0xf]
    %v152 = vld [vmem:[#allocation7 + $0xb0] sm:$0xf]
    %v153 = vld [vmem:[#allocation7 + $0xb4] sm:$0xf]
    %v154 = vld [vmem:[#allocation7 + $0xb8] sm:$0xf]
    %v155 = vld [vmem:[#allocation7 + $0xbc] sm:$0xf]
    %v156 = vld [vmem:[#allocation7 + $0xc0] sm:$0xf]
    %v157 = vld [vmem:[#allocation7 + $0xc4] sm:$0xf]
    %v158 = vld [vmem:[#allocation7 + $0xc8] sm:$0xf]
    %v159 = vld [vmem:[#allocation7 + $0xcc] sm:$0xf]
    %v160 = vld [vmem:[#allocation7 + $0xd0] sm:$0xf]
    %v161 = vld [vmem:[#allocation7 + $0xd4] sm:$0xf]
    %v162 = vld [vmem:[#allocation7 + $0xd8] sm:$0xf]
    %v163 = vld [vmem:[#allocation7 + $0xdc] sm:$0xf]
    %v164 = vld [vmem:[#allocation7 + $0xe0] sm:$0xf]
    %v165 = vld [vmem:[#allocation7 + $0xe4] sm:$0xf]
    %v166 = vld [vmem:[#allocation7 + $0xe8] sm:$0xf]
    %v167 = vld [vmem:[#allocation7 + $0xec] sm:$0xf]
    %v168 = vld [vmem:[#allocation7 + $0xf0] sm:$0xf]
    %v169 = vld [vmem:[#allocation7 + $0xf4] sm:$0xf]
    %v170 = vld [vmem:[#allocation7 + $0xf8] sm:$0xf]
    %v171 = vld [vmem:[#allocation7 + $0xfc] sm:$0xf]
    %v172 = vld [vmem:[#allocation7 + $0x100] sm:$0xf]
    %v173 = vld [vmem:[#allocation7 + $0x104] sm:$0xf]
    %v174 = vld [vmem:[#allocation7 + $0x108] sm:$0xf]
    %v175 = vld [vmem:[#allocation7 + $0x10c] sm:$0xf]
    %v176 = vld [vmem:[#allocation7 + $0x110] sm:$0xf]
    %v177 = vld [vmem:[#allocation7 + $0x114] sm:$0xf]
    %v178 = vld [vmem:[#allocation7 + $0x118] sm:$0xf]
    %v179 = vld [vmem:[#allocation7 + $0x11c] sm:$0xf]
    %v180 = vld [vmem:[#allocation7 + $0x120] sm:$0xf]
    %v181 = vld [vmem:[#allocation7 + $0x124] sm:$0xf]
    %v182 = vld [vmem:[#allocation7 + $0x128] sm:$0xf]
    %v183 = vld [vmem:[#allocation7 + $0x12c] sm:$0xf]
    %v184 = vld [vmem:[#allocation7 + $0x130] sm:$0xf]
    %v185 = vld [vmem:[#allocation7 + $0x134] sm:$0xf]
    %v186 = vld [vmem:[#allocation7 + $0x138] sm:$0xf]
    %v187 = vld [vmem:[#allocation7 + $0x13c] sm:$0xf]
    %v188 = vld [vmem:[#allocation7 + $0x140] sm:$0xf]
    %v189 = vld [vmem:[#allocation7 + $0x144] sm:$0xf]
    %v190 = vld [vmem:[#allocation7 + $0x148] sm:$0xf]
    %v191 = vld [vmem:[#allocation7 + $0x14c] sm:$0xf]
    %v192 = vld [vmem:[#allocation7 + $0x150] sm:$0xf]
    %v193 = vld [vmem:[#allocation7 + $0x154] sm:$0xf]
    %v194 = vld [vmem:[#allocation7 + $0x158] sm:$0xf]
    %v195 = vld [vmem:[#allocation7 + $0x15c] sm:$0xf]
    %v196 = vld [vmem:[#allocation7 + $0x160] sm:$0xf]
    %v197 = vld [vmem:[#allocation7 + $0x164] sm:$0xf]
    %v198 = vld [vmem:[#allocation7 + $0x168] sm:$0xf]
    %v199 = vld [vmem:[#allocation7 + $0x16c] sm:$0xf]
    %v200 = vld [vmem:[#allocation7 + $0x170] sm:$0xf]
    %v201 = vld [vmem:[#allocation7 + $0x174] sm:$0xf]
    %v202 = vld [vmem:[#allocation7 + $0x178] sm:$0xf]
    %v203 = vld [vmem:[#allocation7 + $0x17c] sm:$0xf]
    %v204 = vld [vmem:[#allocation7 + $0x180] sm:$0xf]
    %v205 = vld [vmem:[#allocation7 + $0x184] sm:$0xf]
    %v304 = vunpack.c.l.b16 %v108
    %v305 = vunpack.c.l.b16 %v109
    %v306 = vunpack.c.l.b16 %v110
    %v307 = vunpack.c.l.b16 %v111
    %v308 = vunpack.c.l.b16 %v112
    %v309 = vunpack.c.l.b16 %v113
    %v310 = vunpack.c.l.b16 %v114
    %v311 = vunpack.c.l.b16 %v115
    %v312 = vunpack.c.l.b16 %v116
    %v313 = vunpack.c.l.b16 %v117
    %v314 = vunpack.c.l.b16 %v118
    %v315 = vunpack.c.l.b16 %v119
    %v316 = vunpack.c.l.b16 %v120
    %v317 = vunpack.c.l.b16 %v121
    %v318 = vunpack.c.l.b16 %v122
    %v319 = vunpack.c.l.b16 %v123
    %v320 = vunpack.c.l.b16 %v124
    %v321 = vunpack.c.l.b16 %v125
    %v322 = vunpack.c.l.b16 %v126
    %v323 = vunpack.c.l.b16 %v127
    %v324 = vunpack.c.l.b16 %v128
    %v325 = vunpack.c.l.b16 %v129
    %v326 = vunpack.c.l.b16 %v130
    %v327 = vunpack.c.l.b16 %v131
    %v328 = vunpack.c.l.b16 %v132
    %v329 = vunpack.c.l.b16 %v133
    %v330 = vunpack.c.l.b16 %v134
    %v331 = vunpack.c.l.b16 %v135
    %v332 = vunpack.c.l.b16 %v136
    %v333 = vunpack.c.l.b16 %v137
    %v334 = vunpack.c.l.b16 %v138
    %v335 = vunpack.c.l.b16 %v139
    %v336 = vunpack.c.l.b16 %v140
    %v337 = vunpack.c.l.b16 %v141
    %v338 = vunpack.c.l.b16 %v142
    %v339 = vunpack.c.l.b16 %v143
    %v340 = vunpack.c.l.b16 %v144
    %v341 = vunpack.c.l.b16 %v145
    %v342 = vunpack.c.l.b16 %v146
    %v343 = vunpack.c.l.b16 %v147
    %v344 = vunpack.c.l.b16 %v148
    %v345 = vunpack.c.l.b16 %v149
    %v346 = vunpack.c.l.b16 %v150
    %v347 = vunpack.c.l.b16 %v151
    %v348 = vunpack.c.l.b16 %v152
    %v349 = vunpack.c.l.b16 %v153
    %v350 = vunpack.c.l.b16 %v154
    %v351 = vunpack.c.l.b16 %v155
    %v352 = vunpack.c.l.b16 %v156
    %v353 = vunpack.c.l.b16 %v157
    %v354 = vunpack.c.l.b16 %v158
    %v355 = vunpack.c.l.b16 %v159
    %v356 = vunpack.c.l.b16 %v160
    %v357 = vunpack.c.l.b16 %v161
    %v358 = vunpack.c.l.b16 %v162
    %v359 = vunpack.c.l.b16 %v163
    %v360 = vunpack.c.l.b16 %v164
    %v361 = vunpack.c.l.b16 %v165
    %v362 = vunpack.c.l.b16 %v166
    %v363 = vunpack.c.l.b16 %v167
    %v364 = vunpack.c.l.b16 %v168
    %v365 = vunpack.c.l.b16 %v169
    %v366 = vunpack.c.l.b16 %v170
    %v367 = vunpack.c.l.b16 %v171
    %v368 = vunpack.c.l.b16 %v172
    %v369 = vunpack.c.l.b16 %v173
    %v370 = vunpack.c.l.b16 %v174
    %v371 = vunpack.c.l.b16 %v175
    %v372 = vunpack.c.l.b16 %v176
    %v373 = vunpack.c.l.b16 %v177
    %v374 = vunpack.c.l.b16 %v178
    %v375 = vunpack.c.l.b16 %v179
    %v376 = vunpack.c.l.b16 %v180
    %v377 = vunpack.c.l.b16 %v181
    %v378 = vunpack.c.l.b16 %v182
    %v379 = vunpack.c.l.b16 %v183
    %v380 = vunpack.c.l.b16 %v184
    %v381 = vunpack.c.l.b16 %v185
    %v382 = vunpack.c.l.b16 %v186
    %v383 = vunpack.c.l.b16 %v187
    %v384 = vunpack.c.l.b16 %v188
    %v385 = vunpack.c.l.b16 %v189
    %v386 = vunpack.c.l.b16 %v190
    %v387 = vunpack.c.l.b16 %v191
    %v388 = vunpack.c.l.b16 %v192
    %v389 = vunpack.c.l.b16 %v193
    %v390 = vunpack.c.l.b16 %v194
    %v391 = vunpack.c.l.b16 %v195
    %v392 = vunpack.c.l.b16 %v196
    %v393 = vunpack.c.l.b16 %v197
    %v394 = vunpack.c.l.b16 %v198
    %v395 = vunpack.c.l.b16 %v199
    %v396 = vunpack.c.l.b16 %v200
    %v397 = vunpack.c.l.b16 %v201
    %v398 = vunpack.c.l.b16 %v202
    %v399 = vunpack.c.l.b16 %v203
    %v400 = vunpack.c.l.b16 %v204
    %v401 = vunpack.c.l.b16 %v205
    %v402 = vpack.c.b16 %v305, %v304
    %v403 = vpack.c.b16 %v307, %v306
    %v404 = vpack.c.b16 %v309, %v308
    %v405 = vpack.c.b16 %v311, %v310
    %v406 = vpack.c.b16 %v313, %v312
    %v407 = vpack.c.b16 %v315, %v314
    %v408 = vpack.c.b16 %v317, %v316
    %v409 = vpack.c.b16 %v319, %v318
    %v410 = vpack.c.b16 %v321, %v320
    %v411 = vpack.c.b16 %v323, %v322
    %v412 = vpack.c.b16 %v325, %v324
    %v413 = vpack.c.b16 %v327, %v326
    %v414 = vpack.c.b16 %v329, %v328
    %v415 = vpack.c.b16 %v331, %v330
    %v416 = vpack.c.b16 %v333, %v332
    %v417 = vpack.c.b16 %v335, %v334
    %v418 = vpack.c.b16 %v337, %v336
    %v419 = vpack.c.b16 %v339, %v338
    %v420 = vpack.c.b16 %v341, %v340
    %v421 = vpack.c.b16 %v343, %v342
    %v422 = vpack.c.b16 %v345, %v344
    %v423 = vpack.c.b16 %v347, %v346
    %v424 = vpack.c.b16 %v349, %v348
    %v425 = vpack.c.b16 %v351, %v350
    %v426 = vpack.c.b16 %v353, %v352
    %v427 = vpack.c.b16 %v355, %v354
    %v428 = vpack.c.b16 %v357, %v356
    %v429 = vpack.c.b16 %v359, %v358
    %v430 = vpack.c.b16 %v361, %v360
    %v431 = vpack.c.b16 %v363, %v362
    %v432 = vpack.c.b16 %v365, %v364
    %v433 = vpack.c.b16 %v367, %v366
    %v434 = vpack.c.b16 %v369, %v368
    %v435 = vpack.c.b16 %v371, %v370
    %v436 = vpack.c.b16 %v373, %v372
    %v437 = vpack.c.b16 %v375, %v374
    %v438 = vpack.c.b16 %v377, %v376
    %v439 = vpack.c.b16 %v379, %v378
    %v440 = vpack.c.b16 %v381, %v380
    %v441 = vpack.c.b16 %v383, %v382
    %v442 = vpack.c.b16 %v385, %v384
    %v443 = vpack.c.b16 %v387, %v386
    %v444 = vpack.c.b16 %v389, %v388
    %v445 = vpack.c.b16 %v391, %v390
    %v446 = vpack.c.b16 %v393, %v392
    %v447 = vpack.c.b16 %v395, %v394
    %v448 = vpack.c.b16 %v397, %v396
    %v449 = vpack.c.b16 %v399, %v398
    %v450 = vpack.c.b16 %v401, %v400
    %vm500 = vcmask 130048
    %v502 = vsel %vm500, %v107, 0
    %504 = vmatpush.bf16.msra.mxu0 %v409
    %505 = vmatpush.bf16.msra.mxu0 %v408
    %506 = vmatpush.bf16.msra.mxu0 %v407
    %507 = vmatpush.bf16.msra.mxu0 %v406
    %508 = vmatpush.bf16.msra.mxu0 %v405
    %509 = vmatpush.bf16.msra.mxu0 %v404
    %510 = vmatpush.bf16.msra.mxu0 %v403
    %511 = vmatpush.bf16.msra.mxu0 %v402
    %512 = vmatmul.bf16.gmra.mxu0 %v101
    %v513 = vpop.f32.mrf.mxu0
    %v514 = vadd.f32 0.0, %v513
    %v515 = vpop.f32.mrf.mxu0
    %516 = vdwg.mxu0
    %517 = vmatpush.bf16.msra.mxu0 %v417
    %518 = vmatpush.bf16.msra.mxu0 %v416
    %519 = vmatpush.bf16.msra.mxu0 %v415
    %520 = vmatpush.bf16.msra.mxu0 %v414
    %521 = vmatpush.bf16.msra.mxu0 %v413
    %522 = vmatpush.bf16.msra.mxu0 %v412
    %523 = vmatpush.bf16.msra.mxu0 %v411
    %524 = vmatpush.bf16.msra.mxu0 %v410
    %525 = vmatmul.bf16.gmra.mxu0 %v102
    %v526 = vpop.f32.mrf.mxu0
    %v527 = vadd.f32 %v514, %v526
    %v528 = vpop.f32.mrf.mxu0
    %529 = vdwg.mxu0
    %530 = vmatpush.bf16.msra.mxu0 %v425
    %531 = vmatpush.bf16.msra.mxu0 %v424
    %532 = vmatpush.bf16.msra.mxu0 %v423
    %533 = vmatpush.bf16.msra.mxu0 %v422
    %534 = vmatpush.bf16.msra.mxu0 %v421
    %535 = vmatpush.bf16.msra.mxu0 %v420
    %536 = vmatpush.bf16.msra.mxu0 %v419
    %537 = vmatpush.bf16.msra.mxu0 %v418
    %538 = vmatmul.bf16.gmra.mxu0 %v103
    %v539 = vpop.f32.mrf.mxu0
    %v540 = vadd.f32 %v527, %v539
    %v541 = vpop.f32.mrf.mxu0
    %542 = vdwg.mxu0
    %543 = vmatpush.bf16.msra.mxu0 %v433
    %544 = vmatpush.bf16.msra.mxu0 %v432
    %545 = vmatpush.bf16.msra.mxu0 %v431
    %546 = vmatpush.bf16.msra.mxu0 %v430
    %547 = vmatpush.bf16.msra.mxu0 %v429
    %548 = vmatpush.bf16.msra.mxu0 %v428
    %549 = vmatpush.bf16.msra.mxu0 %v427
    %550 = vmatpush.bf16.msra.mxu0 %v426
    %551 = vmatmul.bf16.gmra.mxu0 %v104
    %v552 = vpop.f32.mrf.mxu0
    %v553 = vadd.f32 %v540, %v552
    %v554 = vpop.f32.mrf.mxu0
    %555 = vdwg.mxu0
    %556 = vmatpush.bf16.msra.mxu0 %v441
    %557 = vmatpush.bf16.msra.mxu0 %v440
    %558 = vmatpush.bf16.msra.mxu0 %v439
    %559 = vmatpush.bf16.msra.mxu0 %v438
    %560 = vmatpush.bf16.msra.mxu0 %v437
    %561 = vmatpush.bf16.msra.mxu0 %v436
    %562 = vmatpush.bf16.msra.mxu0 %v435
    %563 = vmatpush.bf16.msra.mxu0 %v434
    %564 = vmatmul.bf16.gmra.mxu0 %v105
    %v565 = vpop.f32.mrf.mxu0
    %v566 = vadd.f32 %v553, %v565
    %v567 = vpop.f32.mrf.mxu0
    %568 = vdwg.mxu0
    %569 = vmatpush.bf16.msra.mxu0 %v449
    %570 = vmatpush.bf16.msra.mxu0 %v448
    %571 = vmatpush.bf16.msra.mxu0 %v447
    %572 = vmatpush.bf16.msra.mxu0 %v446
    %573 = vmatpush.bf16.msra.mxu0 %v445
    %574 = vmatpush.bf16.msra.mxu0 %v444
    %575 = vmatpush.bf16.msra.mxu0 %v443
    %576 = vmatpush.bf16.msra.mxu0 %v442
    %577 = vmatmul.bf16.gmra.mxu0 %v106
    %v578 = vpop.f32.mrf.mxu0
    %v579 = vadd.f32 %v566, %v578
    %v580 = vpop.f32.mrf.mxu0
    %581 = vdwg.mxu0
    %582 = vmatpush.bf16.msra.mxu0 0
    %583 = vmatpush.bf16.msra.mxu0 0
    %584 = vmatpush.bf16.msra.mxu0 0
    %585 = vmatpush.bf16.msra.mxu0 0
    %586 = vmatpush.bf16.msra.mxu0 0
    %587 = vmatpush.bf16.msra.mxu0 0
    %588 = vmatpush.bf16.msra.mxu0 0
    %589 = vmatpush.bf16.msra.mxu0 %v450
    %590 = vmatmul.bf16.gmra.mxu0 %v502
    %v591 = vpop.f32.mrf.mxu0
    %v592 = vadd.f32 %v579, %v591
    %v593 = vpop.f32.mrf.mxu0
    %594 = vdwg.mxu0
    %s595 = smul.u32 0, 8
    %s596 = scalar_lea.vmem [#allocation2], %s595
    %597 = vst [vmem:[%s596] sm:$0xff] %v592
    %v598 = vld [vmem:[#allocation3] sm:$0x1]
    %v599 = vrot.slane %v592, 4
    %v600 = vadd.f32 %v592, %v599
    %v601 = vrot.slane %v600, 2
    %v602 = vadd.f32 %v600, %v601
    %v603 = vrot.slane %v602, 1
    %v604 = vadd.f32 %v602, %v603
    %v605 = vadd.f32 %v598, %v604
    %606 = vst [vmem:[#allocation3] sm:$0x1] %v605
    %v607 = vld [vmem:[#allocation3 + $0x1] sm:$0x1]
    %v608 = vmul.f32 %v592, %v592
    %v609 = vrot.slane %v608, 4
    %v610 = vadd.f32 %v608, %v609
    %v611 = vrot.slane %v610, 2
    %v612 = vadd.f32 %v610, %v611
    %v613 = vrot.slane %v612, 1
    %v614 = vadd.f32 %v612, %v613
    %v615 = vadd.f32 %v607, %v614
    %616 = vst [vmem:[#allocation3 + $0x1] sm:$0x1] %v615
    // Predicated region
    $region50: #{tpu_custom_call.1} parent=1 // pred_check
      %p617 = pneg %p89
    $region51: #{tpu_custom_call.1} parent=1 // pred_check_branch
      %619 = sbr.rel (%p617) target = $region53
    $region52: #{tpu_custom_call.1} parent=1 // pred_region
      %v620 = vld [vmem:[#allocation3] sm:$0x1]
      %v621 = vmul.f32 %v620, 0.125
      %v622 = vld [vmem:[#allocation3 + $0x1] sm:$0x1]
      %v623 = vmul.f32 %v622, 0.125
      %v624 = vmul.f32 %v621, %v621
      %v625 = vsub.f32 %v623, %v624
      %v626 = vmax.f32 %v625, 0.0
      %v627 = vld [vmem:[%s4] sm:$0x1]
      %v628 = vadd.f32 %v626, 1e-05
      %v629 = vrsqrt.pop %v628
      %v630 = vmul.f32 %v629, %v628
      %v631 = vmul.f32 %v630, %v629
      %v632 = vmul.f32 0.5, %v631
      %v633 = vsub.f32 1.5, %v632
      %v634 = vmul.f32 %v629, %v633
      %vm635 = vweird.f32 %v628
      %vm636 = vweird.f32 %v629
      %vm637 = vmor %vm635, %vm636
      %v638 = vsel %vm637, %v629, %v634
      %v639 = vmul.f32 %v627, %v638
      %v640 = vld [vmem:[%s4 + $0x1] sm:$0x1]
      %v641 = vmul.f32 %v621, %v639
      %v642 = vsub.f32 %v640, %v641
      %v643 = vld [vmem:[#allocation2] sm:$0xff]
      %v644 = vperm.slane %v639, 0
      %v645 = vmul.f32 %v643, %v644
      %v646 = vperm.slane %v642, 0
      %v647 = vadd.f32 %v645, %v646
      %v648 = vmax.f32 %v647, 0.0
      %v649 = vpack.c.bf16 %v648, %v648
      %v650 = vld [vmem:[#allocation9] sm:$0xf]
      %v651 = vld [vmem:[#allocation9 + $0x4] sm:$0xf]
      %v652 = vld [vmem:[#allocation9 + $0x8] sm:$0xf]
      %v653 = vld [vmem:[#allocation9 + $0xc] sm:$0xf]
      %v654 = vld [vmem:[#allocation9 + $0x10] sm:$0xf]
      %v655 = vld [vmem:[#allocation9 + $0x14] sm:$0xf]
      %v656 = vld [vmem:[#allocation9 + $0x18] sm:$0xf]
      %v657 = vld [vmem:[#allocation9 + $0x1c] sm:$0xf]
      %v658 = vld [vmem:[#allocation9 + $0x20] sm:$0xf]
      %v659 = vld [vmem:[#allocation9 + $0x24] sm:$0xf]
      %v660 = vld [vmem:[#allocation9 + $0x28] sm:$0xf]
      %v661 = vld [vmem:[#allocation9 + $0x2c] sm:$0xf]
      %v662 = vld [vmem:[#allocation9 + $0x30] sm:$0xf]
      %v663 = vld [vmem:[#allocation9 + $0x34] sm:$0xf]
      %v664 = vld [vmem:[#allocation9 + $0x38] sm:$0xf]
      %v665 = vld [vmem:[#allocation9 + $0x3c] sm:$0xf]
      %v682 = vunpack.c.l.b16 %v650
      %v683 = vunpack.c.l.b16 %v651
      %v684 = vunpack.c.l.b16 %v652
      %v685 = vunpack.c.l.b16 %v653
      %v686 = vunpack.c.l.b16 %v654
      %v687 = vunpack.c.l.b16 %v655
      %v688 = vunpack.c.l.b16 %v656
      %v689 = vunpack.c.l.b16 %v657
      %v690 = vunpack.c.l.b16 %v658
      %v691 = vunpack.c.l.b16 %v659
      %v692 = vunpack.c.l.b16 %v660
      %v693 = vunpack.c.l.b16 %v661
      %v694 = vunpack.c.l.b16 %v662
      %v695 = vunpack.c.l.b16 %v663
      %v696 = vunpack.c.l.b16 %v664
      %v697 = vunpack.c.l.b16 %v665
      %v698 = vpack.c.b16 %v683, %v682
      %v699 = vpack.c.b16 %v685, %v684
      %v700 = vpack.c.b16 %v687, %v686
      %v701 = vpack.c.b16 %v689, %v688
      %v702 = vpack.c.b16 %v691, %v690
      %v703 = vpack.c.b16 %v693, %v692
      %v704 = vpack.c.b16 %v695, %v694
      %v705 = vpack.c.b16 %v697, %v696
      %714 = vmatpush.bf16.msra.mxu0 %v705
      %715 = vmatpush.bf16.msra.mxu0 %v704
      %716 = vmatpush.bf16.msra.mxu0 %v703
      %717 = vmatpush.bf16.msra.mxu0 %v702
      %718 = vmatpush.bf16.msra.mxu0 %v701
      %719 = vmatpush.bf16.msra.mxu0 %v700
      %720 = vmatpush.bf16.msra.mxu0 %v699
      %721 = vmatpush.bf16.msra.mxu0 %v698
      %722 = vmatmul.bf16.gmra.mxu0 %v649
      %v723 = vpop.f32.mrf.mxu0
      %v724 = vadd.f32 0.0, %v723
      %v725 = vpop.f32.mrf.mxu0
      %726 = vdwg.mxu0
      %v727 = vrot.slane %v724, 4
      %v728 = vadd.f32 %v724, %v727
      %v729 = vrot.slane %v728, 2
      %v730 = vadd.f32 %v728, %v729
      %v731 = vrot.slane %v730, 1
      %v732 = vadd.f32 %v730, %v731
      %v733 = vmul.f32 %v732, 0.125
      %v734 = vmul.f32 %v724, %v724
      %v735 = vrot.slane %v734, 4
      %v736 = vadd.f32 %v734, %v735
      %v737 = vrot.slane %v736, 2
      %v738 = vadd.f32 %v736, %v737
      %v739 = vrot.slane %v738, 1
      %v740 = vadd.f32 %v738, %v739
      %v741 = vmul.f32 %v740, 0.125
      %v742 = vmul.f32 %v733, %v733
      %v743 = vsub.f32 %v741, %v742
      %v744 = vmax.f32 %v743, 0.0
      %v745 = vld [vmem:[%s5] sm:$0x1]
      %v746 = vadd.f32 %v744, 1e-05
      %v747 = vrsqrt.pop %v746
      %v748 = vmul.f32 %v747, %v746
      %v749 = vmul.f32 %v748, %v747
      %v750 = vmul.f32 0.5, %v749
      %v751 = vsub.f32 1.5, %v750
      %v752 = vmul.f32 %v747, %v751
      %vm753 = vweird.f32 %v746
      %vm754 = vweird.f32 %v747
      %vm755 = vmor %vm753, %vm754
      %v756 = vsel %vm755, %v747, %v752
      %v757 = vmul.f32 %v745, %v756
      %v758 = vld [vmem:[%s5 + $0x1] sm:$0x1]
      %v759 = vmul.f32 %v733, %v757
      %v760 = vsub.f32 %v758, %v759
      %v761 = vperm.slane %v757, 0
      %v762 = vmul.f32 %v724, %v761
      %v763 = vperm.slane %v760, 0
      %v764 = vadd.f32 %v762, %v763
      %v765 = vmax.f32 %v764, 0.0
      %v766 = vpack.c.bf16 %v765, %v765
      %v767 = vld [vmem:[#allocation10] sm:$0xf]
      %v768 = vld [vmem:[#allocation10 + $0x4] sm:$0xf]
      %v769 = vld [vmem:[#allocation10 + $0x8] sm:$0xf]
      %v770 = vld [vmem:[#allocation10 + $0xc] sm:$0xf]
      %v771 = vld [vmem:[#allocation10 + $0x10] sm:$0xf]
      %v772 = vld [vmem:[#allocation10 + $0x14] sm:$0xf]
      %v773 = vld [vmem:[#allocation10 + $0x18] sm:$0xf]
      %v774 = vld [vmem:[#allocation10 + $0x1c] sm:$0xf]
      %v775 = vld [vmem:[#allocation10 + $0x20] sm:$0xf]
      %v776 = vld [vmem:[#allocation10 + $0x24] sm:$0xf]
      %v777 = vld [vmem:[#allocation10 + $0x28] sm:$0xf]
      %v778 = vld [vmem:[#allocation10 + $0x2c] sm:$0xf]
      %v779 = vld [vmem:[#allocation10 + $0x30] sm:$0xf]
      %v780 = vld [vmem:[#allocation10 + $0x34] sm:$0xf]
      %v781 = vld [vmem:[#allocation10 + $0x38] sm:$0xf]
      %v782 = vld [vmem:[#allocation10 + $0x3c] sm:$0xf]
      %v783 = vld [vmem:[%s6] sm:$0x1]
      %v785 = vperm.slane %v783, 0
      %v803 = vunpack.c.l.b16 %v767
      %v804 = vunpack.c.l.b16 %v768
      %v805 = vunpack.c.l.b16 %v769
      %v806 = vunpack.c.l.b16 %v770
      %v807 = vunpack.c.l.b16 %v771
      %v808 = vunpack.c.l.b16 %v772
      %v809 = vunpack.c.l.b16 %v773
      %v810 = vunpack.c.l.b16 %v774
      %v811 = vunpack.c.l.b16 %v775
      %v812 = vunpack.c.l.b16 %v776
      %v813 = vunpack.c.l.b16 %v777
      %v814 = vunpack.c.l.b16 %v778
      %v815 = vunpack.c.l.b16 %v779
      %v816 = vunpack.c.l.b16 %v780
      %v817 = vunpack.c.l.b16 %v781
      %v818 = vunpack.c.l.b16 %v782
      %v819 = vpack.c.b16 %v804, %v803
      %v820 = vpack.c.b16 %v806, %v805
      %v821 = vpack.c.b16 %v808, %v807
      %v822 = vpack.c.b16 %v810, %v809
      %v823 = vpack.c.b16 %v812, %v811
      %v824 = vpack.c.b16 %v814, %v813
      %v825 = vpack.c.b16 %v816, %v815
      %v826 = vpack.c.b16 %v818, %v817
      %835 = vmatpush.bf16.msra.mxu0 %v826
      %836 = vmatpush.bf16.msra.mxu0 %v825
      %837 = vmatpush.bf16.msra.mxu0 %v824
      %838 = vmatpush.bf16.msra.mxu0 %v823
      %839 = vmatpush.bf16.msra.mxu0 %v822
      %840 = vmatpush.bf16.msra.mxu0 %v821
      %841 = vmatpush.bf16.msra.mxu0 %v820
      %842 = vmatpush.bf16.msra.mxu0 %v819
      %843 = vmatmul.bf16.gmra.mxu0 %v766
      %v844 = vpop.f32.mrf.mxu0
      %v845 = vadd.f32 %v785, %v844
      %v846 = vpop.f32.mrf.mxu0
      %847 = vdwg.mxu0
      %848 = vst [vmem:[#allocation12] sm:$0xff] %v845
    $region53: #{tpu_custom_call.1} parent=1 // pred_fallthru
      _
    // Predicated region
    $region54: #{tpu_custom_call.1} parent=1 // pred_check
      _
    $region55: #{tpu_custom_call.1} parent=1 // pred_check_branch
      %850 = sbr.rel (0) target = $region57
    $region56: #{tpu_custom_call.1} parent=1 // pred_region
      %852 = vsyncadd [#allocation6], 0
      %s854 = sshll.u32 [#allocation12], 4
      %s855 = int_to_ptr.vmem [resolvable:$true] %s854
      %s856 = sshll.u32 %s7, 4
      %s857 = int_to_ptr.hbm [resolvable:$true] %s856
      %859 = dma.vmem_to_hbm [thread:$0]  %s855, 128, %s857, [#allocation6]
    $region57: #{tpu_custom_call.1} parent=1 // pred_fallthru
      _
    // Predicated region
    $region58: #{tpu_custom_call.1} parent=1 // pred_check
      _
    $region59: #{tpu_custom_call.1} parent=1 // pred_check_branch
      %861 = sbr.rel (0) target = $region61
    $region60: #{tpu_custom_call.1} parent=1 // pred_region
      %863 = dma.done [#allocation6], 128
    $region61: #{tpu_custom_call.1} parent=1 // pred_fallthru
      _
    %864 = vsyncpa [#allocation5], 1
    %865 = vsyncpa [#allocation8], 1
    %866 = vsyncpa [#allocation11], 1
    %867 = vsyncpa [#allocation6], 1

</llo_original>
